<compile_context>
chip_gen: v6e
topology: v6e:2x2x1
jax: 0.10.0
libtpu: 0.0.40
codegen_flags: <defaults>
</compile_context>

<pallas_src>
import jax
import jax.numpy as jnp
from jax.experimental import pallas as pl
from jax.experimental.pallas import tpu as pltpu


# ------------------------------ small helpers ------------------------------


def _round_up(x: int, m: int) -> int:
    return ((x + m - 1) // m) * m


def _round_down(x: int, m: int) -> int:
    return (x // m) * m


def _vmem_capacity_bytes() -> int:
    """Trace-time VMEM capacity query; conservative (v7x) fallback."""
    try:
        info = pltpu.get_tpu_info()
        for attr in ("vmem_capacity_bytes", "vmem_bytes", "vmem_capacity"):
            v = getattr(info, attr, None)
            if isinstance(v, int) and v > 0:
                return v
    except Exception:
        pass
    return 64 * 1024 * 1024


def _pad2d(a, rows: int, cols: int):
    r, c = a.shape
    if r == rows and c == cols:
        return a
    return jnp.pad(a, ((0, rows - r), (0, cols - c)))


# ------------------------------ kernel factory ------------------------------


def _make_unpack_linear_kernel(num_inputs: int, tk: int, full_weight: bool):
    """num_inputs / tk / weight-residency are trace-time constants."""

    def kernel(*refs):
        x_refs = refs[:num_inputs]             # each (tm, tk), native dtype
        w_ref = refs[num_inputs]               # (num_inputs, F_pad) or (num_inputs, tk) f32
        o_ref = refs[num_inputs + 1]           # (tm, 1) f32
        acc_ref = refs[num_inputs + 2]         # (tm, tk) f32 VMEM scratch

        k = pl.program_id(1)

        @pl.when(k == 0)
        def _():
            acc_ref[...] = jnp.zeros_like(acc_ref)

        if full_weight:
            start = pl.multiple_of(k * tk, 128)

        # Fused "concat + matvec" partial products: pure VPU mul + add per step.
        contrib = None
        for j in range(num_inputs):
            x = x_refs[j][...].astype(jnp.float32)          # upcast in-kernel (VPU)
            if full_weight:
                w = w_ref[j:j + 1, pl.ds(start, tk)]        # (1, tk) slice of resident weight
            else:
                w = w_ref[j:j + 1, :]                       # (1, tk) streamed tile
            term = x * w                                    # broadcasts over rows
            contrib = term if contrib is None else contrib + term
        acc_ref[...] += contrib

        # Single XLU lane-reduce + lane-sparse store, only at the last reduction step.
        @pl.when(k == pl.num_programs(1) - 1)
        def _():
            o_ref[...] = jnp.sum(acc_ref[...], axis=-1, keepdims=True).astype(o_ref.dtype)

    return kernel


# --------------------------------- wrapper ----------------------------------


def unpack_linear(inputs, weight):
    """
    inputs: tuple of (B, in_features) arrays (the unpacked args of forward), any float dtype
    weight: (1, in_features * num_inputs) -- PyTorch nn.Linear weight layout
    returns: (B, 1) float32
    """
    num_inputs = len(inputs)
    B, F = inputs[0].shape
    D = F * num_inputs
    x_dtype = inputs[0].dtype
    x_itemsize = jnp.dtype(x_dtype).itemsize

    # ---- generation-aware tile budget ----
    vmem_cap = _vmem_capacity_bytes()
    if vmem_cap >= 100 * 1024 * 1024:        # v5e / v6e: 128 MiB physical VMEM
        x_budget = 48 * 1024 * 1024
    else:                                    # v7x: 64 MiB per TensorCore
        x_budget = 16 * 1024 * 1024

    # ---- tile sizing: tm (batch, sublane-aligned) and tk (features, lane-aligned) ----
    B_pad8 = _round_up(B, 8)
    F_pad128 = _round_up(F, 128)

    def choose_tm(pref: int) -> int:
        if B_pad8 < 16:
            return B_pad8
        half = max(8, _round_down(B_pad8 // 2, 8))   # >= 2 batch tiles -> both v7x TCs busy
        return min(pref, half)

    def choose_tk(tm: int) -> int:
        # Per lane-column bytes: double-buffered x tiles (all inputs) + f32 accumulator.
        per_lane = 2 * num_inputs * tm * x_itemsize + tm * 4
        t = _round_down(max(128, x_budget // per_lane), 128)
        return max(128, min(t, F_pad128))

    tm_pref = 512
    while True:
        tm = choose_tm(tm_pref)
        tk = choose_tk(tm)
        # Prefer shrinking tm before letting tk fall below 512 (when F is large).
        if tk >= min(512, F_pad128) or tm_pref <= 64:
            break
        tm_pref //= 2

    B_pad = _round_up(B_pad8, tm)
    F_pad = _round_up(F_pad128, tk)
    grid = (B_pad // tm, F_pad // tk)        # reduction (feature) axis last

    # ---- operands: native-dtype inputs (zero-padded), f32 weight rows (zero-padded) ----
    xs = tuple(_pad2d(x, B_pad, F_pad) for x in inputs)
    # nn.Linear weight columns [j*F : (j+1)*F] multiply input j (torch.cat order).
    w2d = _pad2d(weight.astype(jnp.float32).reshape(num_inputs, F), num_inputs, F_pad)

    # Keep the whole weight resident in VMEM when it is small (constant block index
    # -> Pallas fetches it once); otherwise stream per-step tiles.
    full_weight = num_inputs * F_pad * 4 <= 4 * 1024 * 1024

    in_specs = [pl.BlockSpec((tm, tk), lambda i, k: (i, k)) for _ in range(num_inputs)]
    if full_weight:
        in_specs.append(pl.BlockSpec((num_inputs, F_pad), lambda i, k: (0, 0)))
    else:
        in_specs.append(pl.BlockSpec((num_inputs, tk), lambda i, k: (0, k)))

    # ---- vmem limit from the real footprint + ~30% headroom ----
    need = 2 * num_inputs * tm * tk * x_itemsize          # double-buffered x tiles
    need += tm * tk * 4                                   # f32 lane-wide accumulator
    need += 2 * tm * 4                                    # output double buffer
    need += 2 * num_inputs * (F_pad if full_weight else tk) * 4
    vmem_limit = int(need * 1.3) + (1 << 20)
    vmem_limit = max(vmem_limit, 16 * 1024 * 1024)
    vmem_limit = min(vmem_limit, int(vmem_cap * 0.75))

    # ---- advisory cost estimate (memory-bound) ----
    weight_reads = 1 if full_weight else (B_pad // tm)
    cost = pl.CostEstimate(
        flops=2 * B * D,
        bytes_accessed=(num_inputs * B_pad * F_pad * x_itemsize
                        + weight_reads * num_inputs * F_pad * 4
                        + B_pad * 4),
        transcendentals=0,
    )

    out = pl.pallas_call(
        _make_unpack_linear_kernel(num_inputs, tk, full_weight),
        out_shape=jax.ShapeDtypeStruct((B_pad, 1), jnp.float32),
        grid_spec=pltpu.PrefetchScalarGridSpec(
            num_scalar_prefetch=0,
            grid=grid,
            in_specs=in_specs,
            out_specs=pl.BlockSpec((tm, 1), lambda i, k: (i, 0)),
            scratch_shapes=[pltpu.VMEM((tm, tk), jnp.float32)],
        ),
        compiler_params=pltpu.CompilerParams(
            dimension_semantics=("parallel", "arbitrary"),
            vmem_limit_bytes=vmem_limit,
        ),
        cost_estimate=cost,
    )(*xs, w2d)

    return out[:B] if B_pad != B else out


if __name__ == "__main__":
    # Small shapes consistent with the module: batch=4, in_features=32, num_inputs=2
    batch = 4
    in_features = 32
    num_inputs = 2
    d_total = in_features * num_inputs

    key = jax.random.PRNGKey(0)
    k_w, *k_xs = jax.random.split(key, 1 + num_inputs)

    # Deterministic parameter init (mimics nn.Linear uniform(-1/sqrt(D), 1/sqrt(D)))
    bound = 1.0 / (d_total ** 0.5)
    weight = jax.random.uniform(
        k_w, (1, d_total), dtype=jnp.float32, minval=-bound, maxval=bound
    )

    inputs = tuple(
        jax.random.normal(k, (batch, in_features), dtype=jnp.float32)
        for k in k_xs
    )

    out = unpack_linear(inputs, weight)
    out = jax.block_until_ready(out)

    # Reference check (plain JAX): cat then matmul with W^T
    ref = jnp.concatenate(inputs, axis=1) @ weight.T
    assert out.shape == (batch, 1)
    assert jnp.allclose(out, ref, atol=1e-5, rtol=1e-5)

    print("KERNEL_OK")
</pallas_src>

<mosaic_0001>
module attributes {stable_mosaic.version = 11 : i64} {
  func.func @kernel(%arg0: i32, %arg1: i32, %arg2: memref<8x128xf32, #tpu.memory_space<vmem>>, %arg3: memref<8x128xf32, #tpu.memory_space<vmem>>, %arg4: memref<2x128xf32, #tpu.memory_space<vmem>>, %arg5: memref<8x1xf32, #tpu.memory_space<vmem>>, %arg6: memref<8x128xf32, #tpu.memory_space<vmem>>) attributes {dimension_semantics = [#tpu.dimension_semantics<parallel>, #tpu.dimension_semantics<arbitrary>], iteration_bounds = array<i64: 1, 1>, scalar_prefetch = 0 : i64, scratch_operands = 1 : i64, tpu.core_type = #tpu.core_type<tc>, window_params = [{transform_indices = @transform_0, window_bounds = array<i64: 8, 128>}, {transform_indices = @transform_1, window_bounds = array<i64: 8, 128>}, {pipeline_mode = #tpu.pipeline_mode<synchronous>, transform_indices = @transform_2, window_bounds = array<i64: 2, 128>}, {transform_indices = @transform_3, window_bounds = array<i64: 8, 1>}]} {
    %c0_i32 = arith.constant 0 : i32
    %0 = arith.cmpi eq, %arg1, %c0_i32 : i32
    %1 = arith.extui %0 : i1 to i32
    %c0_i32_0 = arith.constant 0 : i32
    %2 = arith.cmpi ne, %1, %c0_i32_0 : i32
    scf.if %2 {
      %cst = arith.constant 0.000000e+00 : f32
      %22 = vector.broadcast %cst : f32 to vector<8x128xf32>
      %c0_11 = arith.constant 0 : index
      %c0_12 = arith.constant 0 : index
      %23 = vector.load %arg6[%c0_11, %c0_12] : memref<8x128xf32, #tpu.memory_space<vmem>>, vector<8x128xf32>
      tpu.vector_store %arg6[%c0_11, %c0_12], %22 {strides = array<i32>} : memref<8x128xf32, #tpu.memory_space<vmem>>, vector<8x128xf32>,
    } else {
    }
    %c128_i32 = arith.constant 128 : i32
    %3 = arith.muli %arg1, %c128_i32 : i32
    %4 = tpu.assume_multiple %3, 128 : i32
    %c0 = arith.constant 0 : index
    %c0_1 = arith.constant 0 : index
    %5 = vector.load %arg2[%c0, %c0_1] : memref<8x128xf32, #tpu.memory_space<vmem>>, vector<8x128xf32>
    %c0_2 = arith.constant 0 : index
    %6 = arith.index_cast %4 : i32 to index
    %7 = vector.load %arg4[%c0_2, %6] : memref<2x128xf32, #tpu.memory_space<vmem>>, vector<1x128xf32>
    %8 = vector.broadcast %7 : vector<1x128xf32> to vector<8x128xf32>
    %9 = arith.mulf %5, %8 : vector<8x128xf32>
    %c0_3 = arith.constant 0 : index
    %c0_4 = arith.constant 0 : index
    %10 = vector.load %arg3[%c0_3, %c0_4] : memref<8x128xf32, #tpu.memory_space<vmem>>, vector<8x128xf32>
    %c1 = arith.constant 1 : index
    %11 = arith.index_cast %4 : i32 to index
    %12 = vector.load %arg4[%c1, %11] : memref<2x128xf32, #tpu.memory_space<vmem>>, vector<1x128xf32>
    %13 = vector.broadcast %12 : vector<1x128xf32> to vector<8x128xf32>
    %14 = arith.mulf %10, %13 : vector<8x128xf32>
    %15 = arith.addf %9, %14 : vector<8x128xf32>
    %c0_5 = arith.constant 0 : index
    %c0_6 = arith.constant 0 : index
    %16 = vector.load %arg6[%c0_5, %c0_6] : memref<8x128xf32, #tpu.memory_space<vmem>>, vector<8x128xf32>
    %17 = arith.addf %16, %15 : vector<8x128xf32>
    %c0_7 = arith.constant 0 : index
    %c0_8 = arith.constant 0 : index
    %18 = vector.load %arg6[%c0_7, %c0_8] : memref<8x128xf32, #tpu.memory_space<vmem>>, vector<8x128xf32>
    tpu.vector_store %arg6[%c0_7, %c0_8], %17 {strides = array<i32>} : memref<8x128xf32, #tpu.memory_space<vmem>>, vector<8x128xf32>,
    %c0_i32_9 = arith.constant 0 : i32
    %19 = arith.cmpi eq, %arg1, %c0_i32_9 : i32
    %20 = arith.extui %19 : i1 to i32
    %c0_i32_10 = arith.constant 0 : i32
    %21 = arith.cmpi ne, %20, %c0_i32_10 : i32
    scf.if %21 {
      %c0_11 = arith.constant 0 : index
      %c0_12 = arith.constant 0 : index
      %22 = vector.load %arg6[%c0_11, %c0_12] : memref<8x128xf32, #tpu.memory_space<vmem>>, vector<8x128xf32>
      %cst = arith.constant dense<0.000000e+00> : vector<8xf32>
      %23 = vector.multi_reduction <add>, %22, %cst [1] : vector<8x128xf32> to vector<8xf32>
      %24 = vector.shape_cast %23 : vector<8xf32> to vector<8x1xf32>
      %c0_13 = arith.constant 0 : index
      %c0_14 = arith.constant 0 : index
      %25 = vector.load %arg5[%c0_13, %c0_14] : memref<8x1xf32, #tpu.memory_space<vmem>>, vector<8x1xf32>
      tpu.vector_store %arg5[%c0_13, %c0_14], %24 {strides = array<i32>} : memref<8x1xf32, #tpu.memory_space<vmem>>, vector<8x1xf32>,
    } else {
    }
    return
  }
  func.func @transform_0(%arg0: i32, %arg1: i32) -> (i32, i32) {
    %c0_i32 = arith.constant 0 : i32
    return %arg0, %arg1 : i32, i32
  }
  func.func @transform_1(%arg0: i32, %arg1: i32) -> (i32, i32) {
    %c0_i32 = arith.constant 0 : i32
    return %arg0, %arg1 : i32, i32
  }
  func.func @transform_2(%arg0: i32, %arg1: i32) -> (i32, i32) {
    %c0_i32 = arith.constant 0 : i32
    %c0_i32_0 = arith.constant 0 : i32
    %c0_i32_1 = arith.constant 0 : i32
    return %c0_i32, %c0_i32_0 : i32, i32
  }
  func.func @transform_3(%arg0: i32, %arg1: i32) -> (i32, i32) {
    %c0_i32 = arith.constant 0 : i32
    %c0_i32_0 = arith.constant 0 : i32
    return %arg0, %c0_i32 : i32, i32
  }
}

</mosaic_0001>

<llo_original>
// kernel: tpu_custom_call.1
$region0: #{tpu_custom_call.1}
  #allocation0 [shape = 'u32[]', space=smem, size = 0x4, offset = 0x4, fixed_abs, tag = 'smem constant byte address 0x4 - core index']
  #allocation1 [shape = 'u32[144,128]{1,0:T(1,128)}', space=vmem, size = 0x12000, scoped, tag = 'internal scratch']
  #allocation2 [shape = 'f32[8,128]{1,0:T(8,128)}', space=vmem, size = 0x1000, scoped, tag = 'scratch operand']
  %s0 = inlined_call_operand.hbm [shape: f32[8,128], index: 0, kind: input, shape index: {}]
  %s1 = inlined_call_operand.hbm [shape: f32[8,128], index: 1, kind: input, shape index: {}]
  %s2 = inlined_call_operand.vmem [shape: f32[2,128], index: 2, kind: input, shape index: {}]
  %s3 = inlined_call_operand.vmem [shape: f32[8,1], index: 3, kind: output, shape index: {}]
  %s4 = sld [smem:[#allocation0]]
  $region38: #{tpu_custom_call.1} parent=0
    _
  %s6 = ssub.s32 1, %s4
  %s7 = scalar_select 0, %s6, %s4
  $region1: #{tpu_custom_call.1} parent=0
    #allocation3 [shape = 'u8[4096]{0}', space=vmem, size = 0x1000, scoped, tag = 'input window, operand 0, single buffered']
    #allocation4 [shape = 's32[1]{0}', space=sflag, size = 0x4, scoped, tag = 'scoped memory for tpu_custom_call.1']
    #allocation5 [shape = 'u8[4096]{0}', space=vmem, size = 0x1000, scoped, tag = 'input window, operand 1, single buffered']
    #allocation6 [shape = 's32[1]{0}', space=sflag, size = 0x4, scoped, tag = 'scoped memory for tpu_custom_call.1']
    %8 = vsyncpa [#allocation4], 0
    %9 = vsyncpa [#allocation6], 0
    // Predicated region
    $region2: #{tpu_custom_call.1} parent=1 // pred_check
      _
    $region3: #{tpu_custom_call.1} parent=1 // pred_check_branch
      %11 = sbr.rel (0) target = $region5
    $region4: #{tpu_custom_call.1} parent=1 // pred_region
      %s13 = ssub.s32 128, 128
      %14 = vsyncadd [#allocation4], %s13
      %s16 = sshll.u32 [#allocation3], 4
      %s17 = int_to_ptr.vmem [resolvable:$true] %s16
      %19 = dma.hbm_to_vmem [thread:$0]  %s0, 128, %s17, [#allocation4]
    $region5: #{tpu_custom_call.1} parent=1 // pred_fallthru
      _
    // Predicated region
    $region6: #{tpu_custom_call.1} parent=1 // pred_check
      _
    $region7: #{tpu_custom_call.1} parent=1 // pred_check_branch
      %21 = sbr.rel (0) target = $region9
    $region8: #{tpu_custom_call.1} parent=1 // pred_region
      %s23 = ssub.s32 128, 128
      %24 = vsyncadd [#allocation6], %s23
      %s26 = sshll.u32 [#allocation5], 4
      %s27 = int_to_ptr.vmem [resolvable:$true] %s26
      %29 = dma.hbm_to_vmem [thread:$0]  %s1, 128, %s27, [#allocation6]
    $region9: #{tpu_custom_call.1} parent=1 // pred_fallthru
      _
    // Predicated region
    $region10: #{tpu_custom_call.1} parent=1 // pred_check
      _
    $region11: #{tpu_custom_call.1} parent=1 // pred_check_branch
      %31 = sbr.rel (0) target = $region13
    $region12: #{tpu_custom_call.1} parent=1 // pred_region
      _
    $region13: #{tpu_custom_call.1} parent=1 // pred_fallthru
      _
    // Predicated region
    $region14: #{tpu_custom_call.1} parent=1 // pred_check
      _
    $region15: #{tpu_custom_call.1} parent=1 // pred_check_branch
      %33 = sbr.rel (0) target = $region17
    $region16: #{tpu_custom_call.1} parent=1 // pred_region
      %34 = dma.done [#allocation4], 128
    $region17: #{tpu_custom_call.1} parent=1 // pred_fallthru
      _
    // Predicated region
    $region18: #{tpu_custom_call.1} parent=1 // pred_check
      _
    $region19: #{tpu_custom_call.1} parent=1 // pred_check_branch
      %36 = sbr.rel (0) target = $region21
    $region20: #{tpu_custom_call.1} parent=1 // pred_region
      %37 = dma.done [#allocation6], 128
    $region21: #{tpu_custom_call.1} parent=1 // pred_fallthru
      _
    %p38 = scmp.eq.s32.totalorder 0, 0
    // Predicated region
    $region22: #{tpu_custom_call.1} parent=1 // pred_check
      %p39 = pneg %p38
    $region23: #{tpu_custom_call.1} parent=1 // pred_check_branch
      %41 = sbr.rel (%p39) target = $region25
    $region24: #{tpu_custom_call.1} parent=1 // pred_region
      %42 = vst [vmem:[#allocation2] sm:$0xff] 0.0
    $region25: #{tpu_custom_call.1} parent=1 // pred_fallthru
      _
    %s43 = smul.u32 0, 128
    %v44 = vld [vmem:[#allocation3] sm:$0xff]
    %s45 = sshra.s32 %s43, 7
    %s46 = sand.u32 %s43, 127
    %s47 = scalar_lea.vmem %s2, %s45
    %v48 = vld [vmem:[%s47] sm:$0x1]
    %v49 = vlaneseq
    %v50 = vshrl.u32 %v49, 7
    %v51 = vsub.s32 0, %v50
    %v52 = vrot.slane %v48, %v51
    %v53 = vmul.f32 %v44, %v52
    %v54 = vld [vmem:[#allocation5] sm:$0xff]
    %v55 = vld [vmem:[%s47 + $0x1] sm:$0x1]
    %v56 = vlaneseq
    %v57 = vshrl.u32 %v56, 7
    %v58 = vsub.s32 0, %v57
    %v59 = vrot.slane %v55, %v58
    %v60 = vmul.f32 %v54, %v59
    %v61 = vadd.f32 %v53, %v60
    %v62 = vld [vmem:[#allocation2] sm:$0xff]
    %v63 = vadd.f32 %v62, %v61
    %64 = vst [vmem:[#allocation2] sm:$0xff] %v63
    // Predicated region
    $region26: #{tpu_custom_call.1} parent=1 // pred_check
      %p65 = pneg %p38
    $region27: #{tpu_custom_call.1} parent=1 // pred_check_branch
      %67 = sbr.rel (%p65) target = $region29
    $region28: #{tpu_custom_call.1} parent=1 // pred_region
      %v68 = vld [vmem:[#allocation2] sm:$0xff]
      %69 = vadd.xlane.f32.xlu0 %v68
      %v70 = vpop.xlane.xlu0 %69
      %vm71 = vcmask 7168
      %72 = vst.msk [vmem:[%s3] sm:$0xff] %vm71, %v70
    $region29: #{tpu_custom_call.1} parent=1 // pred_fallthru
      _
    // Predicated region
    $region30: #{tpu_custom_call.1} parent=1 // pred_check
      _
    $region31: #{tpu_custom_call.1} parent=1 // pred_check_branch
      %74 = sbr.rel (0) target = $region33
    $region32: #{tpu_custom_call.1} parent=1 // pred_region
      _
    $region33: #{tpu_custom_call.1} parent=1 // pred_fallthru
      _
    // Predicated region
    $region34: #{tpu_custom_call.1} parent=1 // pred_check
      _
    $region35: #{tpu_custom_call.1} parent=1 // pred_check_branch
      %76 = sbr.rel (0) target = $region37
    $region36: #{tpu_custom_call.1} parent=1 // pred_region
      _
    $region37: #{tpu_custom_call.1} parent=1 // pred_fallthru
      _
    %77 = vsyncpa [#allocation4], 1
    %78 = vsyncpa [#allocation6], 1

</llo_original>
